<compile_context>
chip_gen: v7x
topology: tpu7x:2x2x1
jax: 0.10.0
libtpu: 0.0.40
codegen_flags: <defaults>
</compile_context>

<pallas_src>
import jax
import jax.numpy as jnp
from jax.experimental import pallas as pl
from jax.experimental.pallas import tpu as pltpu

EPS = 1e-5  # nn.BatchNorm2d default


def _bn_pillow_kernel(x_ref, w_ref, b_ref, o_ref):
    # x_ref/o_ref: (N, TC, HW)   w_ref/b_ref: (1, TC, 1)
    x = x_ref[...]
    n, _, hw = x.shape
    inv_count = 1.0 / (n * hw)

    # Single-pass per-channel batch statistics (training-mode BN, biased
    # variance): accumulate sum and sum-of-squares in f32, reduce over N
    # (vreg adds) then HW (one XLU lane reduction each).
    xf = x.astype(jnp.float32)
    s1 = jnp.sum(jnp.sum(xf, axis=0, keepdims=True), axis=2, keepdims=True)
    s2 = jnp.sum(jnp.sum(xf * xf, axis=0, keepdims=True), axis=2, keepdims=True)
    mean = s1 * inv_count                                        # (1, TC, 1)
    var = jnp.maximum(s2 * inv_count - mean * mean, 0.0)         # (1, TC, 1)

    inv_std = jax.lax.rsqrt(var + EPS)

    # Fold normalization + affine into a single per-channel scale/shift.
    a = w_ref[...].astype(jnp.float32) * inv_std                 # (1, TC, 1)
    b = b_ref[...].astype(jnp.float32) - mean * a                # (1, TC, 1)

    # Apply in the input dtype (bf16 stays bf16 on the streaming apply path;
    # for f32 inputs the casts are no-ops).
    o_ref[...] = (x * a.astype(x.dtype) + b.astype(x.dtype)).astype(o_ref.dtype)


def _vmem_capacity_bytes():
    """Physical VMEM per TensorCore; conservative (v7x) fallback."""
    try:
        return int(pltpu.get_tpu_info().vmem_capacity_bytes)
    except Exception:
        return 64 << 20


def _round_up(x, m):
    return -(-x // m) * m


def _choose_c_tile(N, C, HW, itemsize, vmem_cap):
    """Channel tile size balancing VMEM budget and pipelining depth."""
    # Dtype-aware sublane multiple (8 for f32, 16 for bf16, 32 for int8/fp8).
    sub = 8 * max(4 // itemsize, 1)

    # Live VMEM bytes per (channel x spatial element):
    #   2x double-buffered input + 2x double-buffered output (native dtype)
    #   + ~2 block-sized f32 temporaries inside the kernel body.
    live_per_elem = 4 * itemsize + 2 * 4
    per_channel = max(N * HW * live_per_elem, 1)

    # Generation-aware budget: use ~70% of physical VMEM, leave headroom.
    budget = max(int(vmem_cap * 0.70) - (2 << 20), 1 << 20)
    max_tc = max(budget // per_channel, 1)

    if C <= sub:
        # Tiny channel count: a smaller tile would violate the (8,128)
        # layout rule, so take the whole axis (single grid step).
        return C

    # Keep >= ~8 grid steps so BlockSpec pipelining overlaps DMA with compute
    # and the C axis shards across both v7x TensorCores.
    target_tc = _round_up(-(-C // 8), sub)

    tc = (min(max_tc, target_tc, C) // sub) * sub
    if tc < sub:
        # Even one sublane-group of channels exceeds the budget; take the
        # minimum legal tile (vmem_limit is raised accordingly).
        # TODO(synk): two-phase accumulate-then-apply split over H*W for
        # very large N*H*W.
        tc = sub

    # Prefer a tile that divides C evenly (no partial edge block) when it is
    # cheaply available; a partial edge block is still correct (per-channel
    # stats, padded channels' outputs are discarded), just slightly wasteful.
    probe = tc
    while probe > sub and C % probe != 0:
        probe -= sub
    if C % probe == 0:
        tc = probe
    return min(tc, C)


def batch_norm_pillow(x, weight, bias, *, donate_x=False):
    """x: (N, C, H, W); weight, bias: (C,). Returns (N, C, H, W)."""
    N, C, H, W = x.shape
    HW = H * W
    itemsize = jnp.dtype(x.dtype).itemsize
    vmem_cap = _vmem_capacity_bytes()

    # Free view -- no HBM transpose.  H*W is the lane axis.
    x3 = x.reshape(N, C, HW)
    w3 = weight.reshape(1, C, 1)
    b3 = bias.reshape(1, C, 1)

    TC = _choose_c_tile(N, C, HW, itemsize, vmem_cap)
    block_bytes = N * TC * HW * itemsize
    temp_bytes = 2 * N * TC * HW * 4  # in-kernel f32 temporaries
    needed = 4 * block_bytes + temp_bytes + (2 << 20)
    # Clamp to physical VMEM minus headroom (≈56 MiB on v7x, ≈112 MiB v5e/v6e).
    cap_limit = max(vmem_cap - (8 << 20), 16 << 20)
    vmem_limit = int(min(max(needed, 32 << 20), cap_limit))

    y3 = pl.pallas_call(
        _bn_pillow_kernel,
        out_shape=jax.ShapeDtypeStruct((N, C, HW), x.dtype),
        grid=(pl.cdiv(C, TC),),
        in_specs=[
            pl.BlockSpec((N, TC, HW), lambda c: (0, c, 0)),
            pl.BlockSpec((1, TC, 1), lambda c: (0, c, 0)),
            pl.BlockSpec((1, TC, 1), lambda c: (0, c, 0)),
        ],
        out_specs=pl.BlockSpec((N, TC, HW), lambda c: (0, c, 0)),
        compiler_params=pltpu.CompilerParams(
            dimension_semantics=("parallel",),
            vmem_limit_bytes=vmem_limit,
        ),
        input_output_aliases=({0: 0} if donate_x else {}),
    )(x3, w3, b3)

    return y3.reshape(N, C, H, W)


if __name__ == "__main__":
    key = jax.random.PRNGKey(0)
    k_x, k_w = jax.random.split(key)

    N, C, H, W = 2, 4, 16, 16
    x = jax.random.normal(k_x, (N, C, H, W), dtype=jnp.float32)
    # torch.empty((C,)).uniform_() -> uniform [0, 1); bias initialized to zero.
    weight = jax.random.uniform(k_w, (C,), dtype=jnp.float32)
    bias = jnp.zeros((C,), dtype=jnp.float32)

    y = batch_norm_pillow(x, weight, bias)
    jax.block_until_ready(y)

    # Pure-JAX reference (training-mode BN2d, then per-channel affine).
    mean = jnp.mean(x, axis=(0, 2, 3), keepdims=True)
    var = jnp.mean((x - mean) ** 2, axis=(0, 2, 3), keepdims=True)
    ref = (x - mean) / jnp.sqrt(var + EPS)
    ref = ref * weight.reshape(1, C, 1, 1) + bias.reshape(1, C, 1, 1)
    assert jnp.allclose(y, ref, atol=1e-4, rtol=1e-4), "mismatch vs reference"

    print("KERNEL_OK")
</pallas_src>

<mosaic_0001>
module attributes {stable_mosaic.version = 11 : i64} {
  func.func @_bn_pillow_kernel(%arg0: i32, %arg1: memref<2x4x256xf32, #tpu.memory_space<vmem>>, %arg2: memref<1x4x1xf32, #tpu.memory_space<vmem>>, %arg3: memref<1x4x1xf32, #tpu.memory_space<vmem>>, %arg4: memref<2x4x256xf32, #tpu.memory_space<vmem>>) attributes {dimension_semantics = [#tpu.dimension_semantics<parallel>], iteration_bounds = array<i64: 1>, scalar_prefetch = 0 : i64, scratch_operands = 0 : i64, tpu.core_type = #tpu.core_type<tc>, window_params = [{transform_indices = @transform_0, window_bounds = array<i64: 2, 4, 256>}, {transform_indices = @transform_1, window_bounds = array<i64: 1, 4, 1>}, {transform_indices = @transform_2, window_bounds = array<i64: 1, 4, 1>}, {transform_indices = @transform_3, window_bounds = array<i64: 2, 4, 256>}]} {
    %c0 = arith.constant 0 : index
    %c0_0 = arith.constant 0 : index
    %c0_1 = arith.constant 0 : index
    %0 = vector.load %arg1[%c0, %c0_0, %c0_1] : memref<2x4x256xf32, #tpu.memory_space<vmem>>, vector<2x4x256xf32>
    %cst = arith.constant dense<0.000000e+00> : vector<4x256xf32>
    %1 = vector.multi_reduction <add>, %0, %cst [0] : vector<2x4x256xf32> to vector<4x256xf32>
    %2 = vector.shape_cast %1 : vector<4x256xf32> to vector<1x4x256xf32>
    %cst_2 = arith.constant dense<0.000000e+00> : vector<1x4xf32>
    %3 = vector.multi_reduction <add>, %2, %cst_2 [2] : vector<1x4x256xf32> to vector<1x4xf32>
    %4 = vector.shape_cast %3 : vector<1x4xf32> to vector<1x4x1xf32>
    %5 = arith.mulf %0, %0 : vector<2x4x256xf32>
    %cst_3 = arith.constant dense<0.000000e+00> : vector<4x256xf32>
    %6 = vector.multi_reduction <add>, %5, %cst_3 [0] : vector<2x4x256xf32> to vector<4x256xf32>
    %7 = vector.shape_cast %6 : vector<4x256xf32> to vector<1x4x256xf32>
    %cst_4 = arith.constant dense<0.000000e+00> : vector<1x4xf32>
    %8 = vector.multi_reduction <add>, %7, %cst_4 [2] : vector<1x4x256xf32> to vector<1x4xf32>
    %9 = vector.shape_cast %8 : vector<1x4xf32> to vector<1x4x1xf32>
    %cst_5 = arith.constant 0.001953125 : f32
    %10 = vector.broadcast %cst_5 : f32 to vector<1x4x1xf32>
    %11 = arith.mulf %4, %10 : vector<1x4x1xf32>
    %cst_6 = arith.constant 0.001953125 : f32
    %12 = vector.broadcast %cst_6 : f32 to vector<1x4x1xf32>
    %13 = arith.mulf %9, %12 : vector<1x4x1xf32>
    %14 = arith.mulf %11, %11 : vector<1x4x1xf32>
    %15 = arith.subf %13, %14 : vector<1x4x1xf32>
    %cst_7 = arith.constant 0.000000e+00 : f32
    %16 = vector.broadcast %cst_7 : f32 to vector<1x4x1xf32>
    %17 = arith.maximumf %15, %16 : vector<1x4x1xf32>
    %cst_8 = arith.constant 9.99999974E-6 : f32
    %18 = vector.broadcast %cst_8 : f32 to vector<1x4x1xf32>
    %19 = arith.addf %17, %18 : vector<1x4x1xf32>
    %20 = math.rsqrt %19 : vector<1x4x1xf32>
    %c0_9 = arith.constant 0 : index
    %c0_10 = arith.constant 0 : index
    %c0_11 = arith.constant 0 : index
    %21 = vector.load %arg2[%c0_9, %c0_10, %c0_11] : memref<1x4x1xf32, #tpu.memory_space<vmem>>, vector<1x4x1xf32>
    %22 = arith.mulf %21, %20 : vector<1x4x1xf32>
    %c0_12 = arith.constant 0 : index
    %c0_13 = arith.constant 0 : index
    %c0_14 = arith.constant 0 : index
    %23 = vector.load %arg3[%c0_12, %c0_13, %c0_14] : memref<1x4x1xf32, #tpu.memory_space<vmem>>, vector<1x4x1xf32>
    %24 = arith.mulf %11, %22 : vector<1x4x1xf32>
    %25 = arith.subf %23, %24 : vector<1x4x1xf32>
    %26 = vector.broadcast %22 : vector<1x4x1xf32> to vector<2x4x256xf32>
    %27 = arith.mulf %0, %26 : vector<2x4x256xf32>
    %28 = vector.broadcast %25 : vector<1x4x1xf32> to vector<2x4x256xf32>
    %29 = arith.addf %27, %28 : vector<2x4x256xf32>
    %c0_15 = arith.constant 0 : index
    %c0_16 = arith.constant 0 : index
    %c0_17 = arith.constant 0 : index
    %30 = vector.load %arg4[%c0_15, %c0_16, %c0_17] : memref<2x4x256xf32, #tpu.memory_space<vmem>>, vector<2x4x256xf32>
    tpu.vector_store %arg4[%c0_15, %c0_16, %c0_17], %29 {strides = array<i32>} : memref<2x4x256xf32, #tpu.memory_space<vmem>>, vector<2x4x256xf32>,
    return
  }
  func.func @transform_0(%arg0: i32) -> (i32, i32, i32) {
    %c0_i32 = arith.constant 0 : i32
    %c0_i32_0 = arith.constant 0 : i32
    %c0_i32_1 = arith.constant 0 : i32
    return %c0_i32, %arg0, %c0_i32_0 : i32, i32, i32
  }
  func.func @transform_1(%arg0: i32) -> (i32, i32, i32) {
    %c0_i32 = arith.constant 0 : i32
    %c0_i32_0 = arith.constant 0 : i32
    %c0_i32_1 = arith.constant 0 : i32
    return %c0_i32, %arg0, %c0_i32_0 : i32, i32, i32
  }
  func.func @transform_2(%arg0: i32) -> (i32, i32, i32) {
    %c0_i32 = arith.constant 0 : i32
    %c0_i32_0 = arith.constant 0 : i32
    %c0_i32_1 = arith.constant 0 : i32
    return %c0_i32, %arg0, %c0_i32_0 : i32, i32, i32
  }
  func.func @transform_3(%arg0: i32) -> (i32, i32, i32) {
    %c0_i32 = arith.constant 0 : i32
    %c0_i32_0 = arith.constant 0 : i32
    %c0_i32_1 = arith.constant 0 : i32
    return %c0_i32, %arg0, %c0_i32_0 : i32, i32, i32
  }
}

</mosaic_0001>

<llo_original>
// kernel: tpu_custom_call.1
$region0: #{tpu_custom_call.1}
  #allocation0 [shape = 'u32[]', space=smem, size = 0x4, offset = 0x4, fixed_abs, tag = 'smem constant byte address 0x4 - core index']
  #allocation1 [shape = 'u32[144,128]{1,0:T(1,128)}', space=vmem, size = 0x12000, scoped, tag = 'internal scratch']
  %s0 = inlined_call_operand.hbm [shape: f32[2,4,256], index: 0, kind: input, shape index: {}]
  %s1 = inlined_call_operand.vmem [shape: f32[1,4,1], index: 1, kind: input, shape index: {}]
  %s2 = inlined_call_operand.vmem [shape: f32[1,4,1], index: 2, kind: input, shape index: {}]
  %s3 = inlined_call_operand.hbm [shape: f32[2,4,256], index: 3, kind: output, shape index: {}]
  %s4 = sld [smem:[#allocation0]]
  $region26: #{tpu_custom_call.1} parent=0
    _
  %s6 = ssub.s32 1, %s4
  %s7 = scalar_select 0, %s6, %s4
  $region1: #{tpu_custom_call.1} parent=0
    #allocation2 [shape = 'u8[8192]{0}', space=vmem, size = 0x2000, scoped, tag = 'input window, operand 0, single buffered']
    #allocation3 [shape = 's32[1]{0}', space=sflag, size = 0x4, scoped, tag = 'scoped memory for tpu_custom_call.1']
    #allocation4 [shape = 's32[1]{0}', space=sflag, size = 0x4, scoped, tag = 'scoped memory for tpu_custom_call.1']
    #allocation5 [shape = 'u8[8192]{0}', space=vmem, size = 0x2000, scoped, tag = 'output window, operand 0, single buffered']
    %8 = vsyncpa [#allocation3], 0
    %9 = vsyncpa [#allocation4], 0
    // Predicated region
    $region2: #{tpu_custom_call.1} parent=1 // pred_check
      _
    $region3: #{tpu_custom_call.1} parent=1 // pred_check_branch
      %11 = sbr.rel (0) target = $region5
    $region4: #{tpu_custom_call.1} parent=1 // pred_region
      %s13 = ssub.s32 256, 256
      %14 = vsyncadd [#allocation3], %s13
      %s15 = sshll.u32 [#allocation2], 4
      %s16 = int_to_ptr.vmem [resolvable:$true] %s15
      %21 = dma.hbm_to_vmem [thread:$0]  %s0, 256, %s16, [#allocation3], 128, 128, 8
    $region5: #{tpu_custom_call.1} parent=1 // pred_fallthru
      _
    // Predicated region
    $region6: #{tpu_custom_call.1} parent=1 // pred_check
      _
    $region7: #{tpu_custom_call.1} parent=1 // pred_check_branch
      %23 = sbr.rel (0) target = $region9
    $region8: #{tpu_custom_call.1} parent=1 // pred_region
      _
    $region9: #{tpu_custom_call.1} parent=1 // pred_fallthru
      _
    // Predicated region
    $region10: #{tpu_custom_call.1} parent=1 // pred_check
      _
    $region11: #{tpu_custom_call.1} parent=1 // pred_check_branch
      %25 = sbr.rel (0) target = $region13
    $region12: #{tpu_custom_call.1} parent=1 // pred_region
      _
    $region13: #{tpu_custom_call.1} parent=1 // pred_fallthru
      _
    // Predicated region
    $region14: #{tpu_custom_call.1} parent=1 // pred_check
      _
    $region15: #{tpu_custom_call.1} parent=1 // pred_check_branch
      %27 = sbr.rel (0) target = $region17
    $region16: #{tpu_custom_call.1} parent=1 // pred_region
      %28 = dma.done [#allocation3], 256
    $region17: #{tpu_custom_call.1} parent=1 // pred_fallthru
      _
    %v29 = vld [vmem:[#allocation2] sm:$0xff]
    %v30 = vld [vmem:[#allocation2 + $0x8] sm:$0xff]
    %v33 = vcombine.high %v29, %v29
    %v34 = vcombine.high %v30, %v30
    %vm37 = vcmask 1043456
    %v38 = vsel %vm37, %v29, 0.0
    %v39 = vsel %vm37, %v30, 0.0
    %v40 = vadd.f32 %v38, %v39
    %v41 = vsel %vm37, %v33, 0.0
    %v42 = vsel %vm37, %v34, 0.0
    %v43 = vadd.f32 %v41, %v42
    %v44 = vsel %vm37, %v40, 0.0
    %v45 = vsel %vm37, %v43, 0.0
    %v46 = vadd.f32 %v44, %v45
    %47 = vadd.xlane.f32.xlu0 %v46
    %v48 = vpop.xlane.xlu0 %47
    %v49 = vmul.f32 %v29, %v29
    %v50 = vmul.f32 %v30, %v30
    %v53 = vcombine.high %v49, %v49
    %v54 = vcombine.high %v50, %v50
    %v57 = vsel %vm37, %v49, 0.0
    %v58 = vsel %vm37, %v50, 0.0
    %v59 = vadd.f32 %v57, %v58
    %v60 = vsel %vm37, %v53, 0.0
    %v61 = vsel %vm37, %v54, 0.0
    %v62 = vadd.f32 %v60, %v61
    %v63 = vsel %vm37, %v59, 0.0
    %v64 = vsel %vm37, %v62, 0.0
    %v65 = vadd.f32 %v63, %v64
    %66 = vadd.xlane.f32.xlu0 %v65
    %v67 = vpop.xlane.xlu0 %66
    %v68 = vmul.f32 %v48, 0.001953125
    %v69 = vmul.f32 %v67, 0.001953125
    %v70 = vmul.f32 %v68, %v68
    %v71 = vsub.f32 %v69, %v70
    %v72 = vmax.f32 %v71, 0.0
    %v73 = vadd.f32 %v72, 1e-05
    %v74 = vrsqrt.pop %v73
    %v75 = vld [vmem:[%s1] sm:$0xf]
    %v76 = vmul.f32 %v75, %v74
    %v77 = vld [vmem:[%s2] sm:$0xf]
    %v78 = vmul.f32 %v68, %v76
    %v79 = vsub.f32 %v77, %v78
    %81 = vset.pattern.permute.xlu0 0
    %82 = vperm.xlu0 %81, %v76
    %v83 = vpop.permute.xlu0 %82
    %v85 = vunpack.c.l.s4 839922192
    %v86 = vunpack.c.0.s8 %v85
    %v87 = vlaneseq
    %v88 = vshrl.u32 %v87, 7
    %v89 = vsub.s32 %v86, %v88
    %v90 = vrot.slane %v83, %v89
    %v92 = vmul.f32 %v29, %v90
    %v93 = vmul.f32 %v30, %v90
    %95 = vset.pattern.permute.xlu0 0
    %96 = vperm.xlu0 %95, %v79
    %v97 = vpop.permute.xlu0 %96
    %v99 = vunpack.c.l.s4 839922192
    %v100 = vunpack.c.0.s8 %v99
    %v101 = vlaneseq
    %v102 = vshrl.u32 %v101, 7
    %v103 = vsub.s32 %v100, %v102
    %v104 = vrot.slane %v97, %v103
    %v106 = vadd.f32 %v92, %v104
    %v107 = vadd.f32 %v93, %v104
    %108 = vst [vmem:[#allocation5] sm:$0xff] %v106
    %109 = vst [vmem:[#allocation5 + $0x8] sm:$0xff] %v107
    // Predicated region
    $region18: #{tpu_custom_call.1} parent=1 // pred_check
      _
    $region19: #{tpu_custom_call.1} parent=1 // pred_check_branch
      %111 = sbr.rel (0) target = $region21
    $region20: #{tpu_custom_call.1} parent=1 // pred_region
      %s113 = ssub.s32 256, 256
      %114 = vsyncadd [#allocation4], %s113
      %s115 = sshll.u32 [#allocation5], 4
      %s116 = int_to_ptr.vmem [resolvable:$true] %s115
      %121 = dma.vmem_to_hbm [thread:$0]  %s116, 256, %s3, [#allocation4], 128, 128, 8
    $region21: #{tpu_custom_call.1} parent=1 // pred_fallthru
      _
    // Predicated region
    $region22: #{tpu_custom_call.1} parent=1 // pred_check
      _
    $region23: #{tpu_custom_call.1} parent=1 // pred_check_branch
      %123 = sbr.rel (0) target = $region25
    $region24: #{tpu_custom_call.1} parent=1 // pred_region
      %124 = dma.done [#allocation4], 256
    $region25: #{tpu_custom_call.1} parent=1 // pred_fallthru
      _
    %125 = vsyncpa [#allocation3], 1
    %126 = vsyncpa [#allocation4], 1

</llo_original>
